<compile_context>
chip_gen: v7x
topology: tpu7x:2x2x1
jax: 0.10.0
libtpu: 0.0.40
codegen_flags: <defaults>
</compile_context>

<pallas_src>
import functools
from typing import NamedTuple

import jax
import jax.numpy as jnp
from jax.experimental import pallas as pl
from jax.experimental.pallas import tpu as pltpu


def _round_up(x, m):
    return ((x + m - 1) // m) * m


def _cdiv(a, b):
    return -(-a // b)


# -----------------------------------------------------------------------------
# Hardware / feature detection (all failure-safe, with conservative fallbacks).
# -----------------------------------------------------------------------------

def _vmem_capacity_bytes():
    """Per-core VMEM capacity; conservative 64 MiB (v7x) if undetectable."""
    try:
        info = pltpu.get_tpu_info()
        for attr in ("vmem_capacity_bytes", "vmem_size_bytes", "vmem_bytes"):
            v = getattr(info, attr, None)
            if v:
                return int(v)
    except Exception:
        pass
    return 64 * 1024 * 1024


def _has_bf16_vpu():
    """v6e/v7x have a bf16 VPU path; v5e and older do not."""
    try:
        kind = jax.devices()[0].device_kind.lower()
    except Exception:
        return False
    return not any(old in kind for old in ("v2", "v3", "v4", "v5"))


@functools.lru_cache(maxsize=1)
def _single_buffer_supported():
    """Probe whether pipeline_mode=pl.Buffered(1) lowers on this jax/libtpu."""
    try:
        def _copy(x_ref, o_ref):
            o_ref[...] = x_ref[...]

        x = jnp.zeros((8, 128), jnp.float32)
        out = pl.pallas_call(
            _copy,
            out_shape=jax.ShapeDtypeStruct((8, 128), jnp.float32),
            grid=(1,),
            in_specs=[pl.BlockSpec((8, 128), lambda i: (0, 0),
                                   pipeline_mode=pl.Buffered(1))],
            out_specs=pl.BlockSpec((8, 128), lambda i: (0, 0)),
        )(x)
        jax.block_until_ready(out)
        return True
    except Exception:
        return False


# -----------------------------------------------------------------------------
# One-time parameter preparation (review item: no per-call weight re-pad/cast).
# -----------------------------------------------------------------------------

class MLPConfig(NamedTuple):
    n_classes: int            # un-padded output width (for the final slice)
    th: int                   # hidden tile (== H_pad => weights fully resident)
    block_b: int              # requested batch tile
    bf16_epilogue: bool       # bias+ReLU in bf16 (v6e/v7x) vs f32 (v5e)
    single_buffer_weights: bool
    vmem_budget_bytes: int    # per-generation scoped-VMEM cap


def prepare_mlp_params(w1, b1, w2, b2, *, block_b=None, bf16_epilogue=None,
                       hidden_tile=None):
    """Pad weights to lane-dense multiples of 128, cast matmul operands to
    bf16, and choose the hidden tiling — once, outside the forward path."""
    F_in, H = w1.shape
    C = w2.shape[1]
    b1 = jnp.asarray(b1).reshape(1, H)
    b2 = jnp.asarray(b2).reshape(1, C)

    vmem_cap = _vmem_capacity_bytes()
    budget = min(100 << 20, int(0.85 * vmem_cap))
    if block_b is None:
        # Generation-aware default: 512 on 128-MiB-VMEM chips, 256 on v7x.
        block_b = 512 if vmem_cap >= (96 << 20) else 256
    if bf16_epilogue is None:
        bf16_epilogue = _has_bf16_vpu()
    single_buffer = _single_buffer_supported()

    F_pad = _round_up(F_in, 128)
    C_pad = _round_up(C, 128)
    H_128 = _round_up(H, 128)

    # Hidden tiling: keep the full weights resident when the (single-buffered)
    # bf16 weights fit in ~half the VMEM budget; otherwise stream TH-wide
    # tiles over a second (reduction) grid axis.
    weight_budget = budget // 2
    if hidden_tile is not None:
        th = min(_round_up(hidden_tile, 128), H_128)
    elif 2 * (F_pad * H_128 + H_128 * C_pad) <= weight_budget:
        th = H_128
    else:
        th = H_128
        # Streamed tiles are double-buffered; they must fit the weight budget.
        while th > 128 and 2 * 2 * (F_pad * th + th * C_pad) > weight_budget:
            th = max(128, _round_up(th // 2, 128))
    H_pad = _round_up(H, th)

    # Zero padding is numerically exact: padded input features multiply zero
    # weight rows, padded hidden units are relu(0+0)=0 and hit zero rows of
    # w2, and padded output columns are sliced off after the call.
    w1_p = jnp.pad(w1, ((0, F_pad - F_in), (0, H_pad - H))).astype(jnp.bfloat16)
    b1_p = jnp.pad(b1, ((0, 0), (0, H_pad - H)))                    # f32
    w2_p = jnp.pad(w2, ((0, H_pad - H), (0, C_pad - C))).astype(jnp.bfloat16)
    b2_p = jnp.pad(b2, ((0, 0), (0, C_pad - C)))                    # f32

    cfg = MLPConfig(n_classes=int(C), th=int(th), block_b=int(block_b),
                    bf16_epilogue=bool(bf16_epilogue),
                    single_buffer_weights=bool(single_buffer),
                    vmem_budget_bytes=int(budget))
    return (w1_p, b1_p, w2_p, b2_p), cfg


# -----------------------------------------------------------------------------
# Kernels.
# -----------------------------------------------------------------------------

def _epilogue(h_f32, b1_blk, bf16_epilogue):
    """Dropout(eval)=identity, then bias + ReLU + downcast to bf16 for MXU #2."""
    if bf16_epilogue:   # bf16 VPU (v6e/v7x): halves the elementwise work
        return jnp.maximum(h_f32.astype(jnp.bfloat16)
                           + b1_blk.astype(jnp.bfloat16), 0.0)
    return jnp.maximum(h_f32 + b1_blk, 0.0).astype(jnp.bfloat16)   # f32 (v5e)


def _mlp_kernel_resident(x_ref, w1_ref, b1_ref, w2_ref, b2_ref, o_ref, *,
                         bf16_epilogue):
    # fc: (BM, F) @ (F, H) on the MXU — bf16 operands, f32 accumulation.
    h = jnp.dot(x_ref[...], w1_ref[...], preferred_element_type=jnp.float32)
    h = _epilogue(h, b1_ref[...], bf16_epilogue)
    # fc1: (BM, H) @ (H, C).
    out = jnp.dot(h, w2_ref[...], preferred_element_type=jnp.float32)
    o_ref[...] = (out + b2_ref[...]).astype(o_ref.dtype)


def _mlp_kernel_streamed(x_ref, w1_ref, b1_ref, w2_ref, b2_ref, o_ref, acc_ref,
                         *, bf16_epilogue):
    # Hidden dimension streamed over grid axis 1 ("arbitrary", last).
    j = pl.program_id(1)

    @pl.when(j == 0)
    def _():
        acc_ref[...] = jnp.zeros_like(acc_ref)

    h = jnp.dot(x_ref[...], w1_ref[...], preferred_element_type=jnp.float32)
    h = _epilogue(h, b1_ref[...], bf16_epilogue)
    acc_ref[...] += jnp.dot(h, w2_ref[...], preferred_element_type=jnp.float32)

    @pl.when(j == pl.num_programs(1) - 1)
    def _():
        o_ref[...] = (acc_ref[...] + b2_ref[...]).astype(o_ref.dtype)


# -----------------------------------------------------------------------------
# Forward wrapper.
# -----------------------------------------------------------------------------

def _estimate_vmem_bytes(BM, F_pad, th, C_pad, nh, single_buffer):
    BF16, F32 = 2, 4
    wbuf = 1 if (single_buffer and nh == 1) else 2
    weights = wbuf * (F_pad * th * BF16 + th * C_pad * BF16)
    biases = 2 * (8 * th * F32 + 8 * C_pad * F32)          # sublane-padded
    x_bufs = 2 * BM * F_pad * BF16
    out_bufs = 2 * BM * C_pad * F32
    acc = BM * C_pad * F32 if nh > 1 else 0
    h_tmp = BM * th * (F32 + BF16)                          # f32 h + bf16 cast
    return weights + biases + x_bufs + out_bufs + acc + h_tmp


@functools.partial(jax.jit, static_argnames=("cfg",))
def _mlp_forward_padded(x, w1_p, b1_p, w2_p, b2_p, *, cfg):
    B, F_in = x.shape
    F_pad, H_pad = w1_p.shape
    C_pad = w2_p.shape[1]
    th = cfg.th
    nh = H_pad // th
    sb = cfg.single_buffer_weights

    # Batch tile: multiple of 8, balanced across grid steps (minimal batch
    # padding waste), then shrunk if the VMEM estimate exceeds the budget.
    block_b = max(8, _round_up(cfg.block_b, 8))
    if B <= block_b:
        BM = _round_up(B, 8)
    else:
        BM = _round_up(_cdiv(B, _cdiv(B, block_b)), 8)
    est = _estimate_vmem_bytes(BM, F_pad, th, C_pad, nh, sb)
    while BM > 8 and int(1.25 * est) + (2 << 20) > cfg.vmem_budget_bytes:
        BM = max(8, _round_up(BM // 2, 8))
        est = _estimate_vmem_bytes(BM, F_pad, th, C_pad, nh, sb)
    B_pad = _round_up(B, BM)
    nb = B_pad // BM

    # Per-call work touches only the activations (weights prepared once).
    x_p = jnp.pad(x.astype(jnp.bfloat16), ((0, B_pad - B), (0, F_pad - F_in)))

    vmem_limit = int(min(cfg.vmem_budget_bytes,
                         max(int(1.25 * est) + (2 << 20), 32 << 20)))
    w_reads = 1 if nh == 1 else nb
    cost = pl.CostEstimate(
        flops=int(2 * B_pad * (F_pad * H_pad + H_pad * C_pad)),
        transcendentals=0,
        bytes_accessed=int(x_p.size * 2 + B_pad * C_pad * 4
                           + w_reads * (w1_p.size * 2 + w2_p.size * 2
                                        + b1_p.size * 4 + b2_p.size * 4)),
    )

    def _maybe_single(shape, index_map):
        # Single-buffer the big constant-index weight blocks (halves resident
        # weight VMEM); falls back to default double-buffering if unsupported.
        if sb:
            return pl.BlockSpec(shape, index_map, pipeline_mode=pl.Buffered(1))
        return pl.BlockSpec(shape, index_map)

    if nh == 1:
        # Weights fully resident in VMEM; x / out tiles stream over the batch.
        kernel = functools.partial(_mlp_kernel_resident,
                                   bf16_epilogue=cfg.bf16_epilogue)
        grid_spec = pltpu.PrefetchScalarGridSpec(
            num_scalar_prefetch=0,
            grid=(nb,),
            in_specs=[
                pl.BlockSpec((BM, F_pad), lambda i: (i, 0)),
                _maybe_single((F_pad, H_pad), lambda i: (0, 0)),
                pl.BlockSpec((1, H_pad), lambda i: (0, 0)),
                _maybe_single((H_pad, C_pad), lambda i: (0, 0)),
                pl.BlockSpec((1, C_pad), lambda i: (0, 0)),
            ],
            out_specs=pl.BlockSpec((BM, C_pad), lambda i: (i, 0)),
        )
        dims = ("parallel",)
    else:
        # v7x-style fallback: stream TH-wide hidden tiles, accumulate in VMEM.
        kernel = functools.partial(_mlp_kernel_streamed,
                                   bf16_epilogue=cfg.bf16_epilogue)
        grid_spec = pltpu.PrefetchScalarGridSpec(
            num_scalar_prefetch=0,
            grid=(nb, nh),
            in_specs=[
                pl.BlockSpec((BM, F_pad), lambda i, j: (i, 0)),
                pl.BlockSpec((F_pad, th), lambda i, j: (0, j)),
                pl.BlockSpec((1, th), lambda i, j: (0, j)),
                pl.BlockSpec((th, C_pad), lambda i, j: (j, 0)),
                pl.BlockSpec((1, C_pad), lambda i, j: (0, 0)),
            ],
            out_specs=pl.BlockSpec((BM, C_pad), lambda i, j: (i, 0)),
            scratch_shapes=[pltpu.VMEM((BM, C_pad), jnp.float32)],
        )
        dims = ("parallel", "arbitrary")     # reduction axis last

    out_p = pl.pallas_call(
        kernel,
        out_shape=jax.ShapeDtypeStruct((B_pad, C_pad), jnp.float32),
        grid_spec=grid_spec,
        compiler_params=pltpu.CompilerParams(
            dimension_semantics=dims,
            vmem_limit_bytes=vmem_limit,
        ),
        cost_estimate=cost,
    )(x_p, w1_p, b1_p, w2_p, b2_p)

    return out_p[:B, :cfg.n_classes]


def mlp_forward(x, params, cfg):
    w1_p, b1_p, w2_p, b2_p = params
    return _mlp_forward_padded(x, w1_p, b1_p, w2_p, b2_p, cfg=cfg)


# -----------------------------------------------------------------------------
# Init + references + test.
# -----------------------------------------------------------------------------

def init_params(key, input_feature_size, hidden_size, n_classes,
                dtype=jnp.float32):
    """Mimics nn.Linear's uniform(-1/sqrt(fan_in), 1/sqrt(fan_in)) init."""
    k1, k2, k3, k4 = jax.random.split(key, 4)
    bound1 = 1.0 / jnp.sqrt(input_feature_size)
    bound2 = 1.0 / jnp.sqrt(hidden_size)
    # Stored as (in, out) so the kernel computes x @ W.
    w1 = jax.random.uniform(k1, (input_feature_size, hidden_size),
                            minval=-bound1, maxval=bound1, dtype=dtype)
    b1 = jax.random.uniform(k2, (1, hidden_size),
                            minval=-bound1, maxval=bound1, dtype=dtype)
    w2 = jax.random.uniform(k3, (hidden_size, n_classes),
                            minval=-bound2, maxval=bound2, dtype=dtype)
    b2 = jax.random.uniform(k4, (1, n_classes),
                            minval=-bound2, maxval=bound2, dtype=dtype)
    return w1, b1, w2, b2


def _reference_bf16(x, w1, b1, w2, b2, bf16_epilogue):
    """Plain-JAX reference mirroring the kernel's bf16-operand recipe."""
    xb, w1b, w2b = (a.astype(jnp.bfloat16) for a in (x, w1, w2))
    h = jnp.dot(xb, w1b, preferred_element_type=jnp.float32)
    b1r = b1.reshape(1, -1)
    if bf16_epilogue:
        hb = jnp.maximum(h.astype(jnp.bfloat16) + b1r.astype(jnp.bfloat16), 0.0)
    else:
        hb = jnp.maximum(h + b1r, 0.0).astype(jnp.bfloat16)
    return jnp.dot(hb, w2b, preferred_element_type=jnp.float32) + b2.reshape(1, -1)


def _check(out, x, w1, b1, w2, b2, bf16_epilogue):
    ref_bf16 = _reference_bf16(x, w1, b1, w2, b2, bf16_epilogue)
    ref_f32 = jnp.maximum(x @ w1 + b1.reshape(1, -1), 0.0) @ w2 + b2.reshape(1, -1)
    assert jnp.allclose(out, ref_bf16, atol=1e-2, rtol=1e-2)   # wiring check
    assert jnp.allclose(out, ref_f32, atol=5e-2, rtol=5e-2)    # bf16 error bound


if __name__ == "__main__":
    key = jax.random.PRNGKey(0)
    k1, k2, k3, k4 = jax.random.split(key, 4)

    # --- Case 1: small MLP — resident-weight path (1-D batch grid).
    B, F, H, C = 8, 32, 32, 16
    x = jax.random.normal(k1, (B, F), dtype=jnp.float32)
    w1, b1, w2, b2 = init_params(k2, F, H, C)
    params, cfg = prepare_mlp_params(w1, b1, w2, b2)     # one-time prep
    out = jax.block_until_ready(mlp_forward(x, params, cfg))
    assert out.shape == (B, C)
    _check(out, x, w1, b1, w2, b2, cfg.bf16_epilogue)

    # --- Case 2: force the hidden-streaming path (2-D grid + accumulator)
    #     and a non-multiple-of-8 batch, to exercise the fallback tiling.
    B, F, H, C = 20, 64, 256, 48
    x = jax.random.normal(k3, (B, F), dtype=jnp.float32)
    w1, b1, w2, b2 = init_params(k4, F, H, C)
    params, cfg = prepare_mlp_params(w1, b1, w2, b2, hidden_tile=128)
    out = jax.block_until_ready(mlp_forward(x, params, cfg))
    assert out.shape == (B, C)
    _check(out, x, w1, b1, w2, b2, cfg.bf16_epilogue)

    print("KERNEL_OK")
</pallas_src>

<mosaic_0001>
module attributes {stable_mosaic.version = 11 : i64} {
  func.func @_copy(%arg0: i32, %arg1: memref<8x128xf32, #tpu.memory_space<vmem>>, %arg2: memref<8x128xf32, #tpu.memory_space<vmem>>) attributes {dimension_semantics = [#tpu.dimension_semantics<arbitrary>], iteration_bounds = array<i64: 1>, scalar_prefetch = 0 : i64, scratch_operands = 0 : i64, tpu.core_type = #tpu.core_type<tc>, window_params = [{pipeline_mode = #tpu.pipeline_mode<synchronous>, transform_indices = @transform_0, window_bounds = array<i64: 8, 128>}, {pipeline_mode = #tpu.pipeline_mode<synchronous>, transform_indices = @transform_1, window_bounds = array<i64: 8, 128>}]} {
    %c0 = arith.constant 0 : index
    %c0_0 = arith.constant 0 : index
    %0 = vector.load %arg1[%c0, %c0_0] : memref<8x128xf32, #tpu.memory_space<vmem>>, vector<8x128xf32>
    %c0_1 = arith.constant 0 : index
    %c0_2 = arith.constant 0 : index
    %1 = vector.load %arg2[%c0_1, %c0_2] : memref<8x128xf32, #tpu.memory_space<vmem>>, vector<8x128xf32>
    tpu.vector_store %arg2[%c0_1, %c0_2], %0 {strides = array<i32>} : memref<8x128xf32, #tpu.memory_space<vmem>>, vector<8x128xf32>,
    return
  }
  func.func @transform_0(%arg0: i32) -> (i32, i32) {
    %c0_i32 = arith.constant 0 : i32
    %c0_i32_0 = arith.constant 0 : i32
    %c0_i32_1 = arith.constant 0 : i32
    return %c0_i32, %c0_i32_0 : i32, i32
  }
  func.func @transform_1(%arg0: i32) -> (i32, i32) {
    %c0_i32 = arith.constant 0 : i32
    %c0_i32_0 = arith.constant 0 : i32
    %c0_i32_1 = arith.constant 0 : i32
    return %c0_i32, %c0_i32_0 : i32, i32
  }
}

module attributes {stable_mosaic.version = 11 : i64} {
  func.func @_mlp_kernel_resident(%arg0: i32, %arg1: memref<8x128xbf16, #tpu.memory_space<vmem>>, %arg2: memref<128x128xbf16, #tpu.memory_space<vmem>>, %arg3: memref<1x128xf32, #tpu.memory_space<vmem>>, %arg4: memref<128x128xbf16, #tpu.memory_space<vmem>>, %arg5: memref<1x128xf32, #tpu.memory_space<vmem>>, %arg6: memref<8x128xf32, #tpu.memory_space<vmem>>) attributes {dimension_semantics = [#tpu.dimension_semantics<parallel>], iteration_bounds = array<i64: 1>, scalar_prefetch = 0 : i64, scratch_operands = 0 : i64, tpu.core_type = #tpu.core_type<tc>, window_params = [{transform_indices = @transform_0, window_bounds = array<i64: 8, 128>}, {pipeline_mode = #tpu.pipeline_mode<synchronous>, transform_indices = @transform_1, window_bounds = array<i64: 128, 128>}, {pipeline_mode = #tpu.pipeline_mode<synchronous>, transform_indices = @transform_2, window_bounds = array<i64: 1, 128>}, {pipeline_mode = #tpu.pipeline_mode<synchronous>, transform_indices = @transform_3, window_bounds = array<i64: 128, 128>}, {pipeline_mode = #tpu.pipeline_mode<synchronous>, transform_indices = @transform_4, window_bounds = array<i64: 1, 128>}, {transform_indices = @transform_5, window_bounds = array<i64: 8, 128>}]} {
    %c0 = arith.constant 0 : index
    %c0_0 = arith.constant 0 : index
    %0 = vector.load %arg1[%c0, %c0_0] : memref<8x128xbf16, #tpu.memory_space<vmem>>, vector<8x128xbf16>
    %c0_1 = arith.constant 0 : index
    %c0_2 = arith.constant 0 : index
    %1 = vector.load %arg2[%c0_1, %c0_2] : memref<128x128xbf16, #tpu.memory_space<vmem>>, vector<128x128xbf16>
    %cst = arith.constant dense<0.000000e+00> : vector<8x128xf32>
    %2 = tpu.matmul %0, %1, %cst {dimension_numbers = #tpu.dot_dimension_numbers<[1], [0], [0], [1], [0, 0, 1, 1], [], []>} : vector<8x128xbf16>, vector<128x128xbf16>, vector<8x128xf32> -> vector<8x128xf32>
    %c0_3 = arith.constant 0 : index
    %c0_4 = arith.constant 0 : index
    %3 = vector.load %arg3[%c0_3, %c0_4] : memref<1x128xf32, #tpu.memory_space<vmem>>, vector<1x128xf32>
    %4 = arith.truncf %2 : vector<8x128xf32> to vector<8x128xbf16>
    %5 = arith.truncf %3 : vector<1x128xf32> to vector<1x128xbf16>
    %6 = vector.broadcast %5 : vector<1x128xbf16> to vector<8x128xbf16>
    %7 = arith.addf %4, %6 : vector<8x128xbf16>
    %cst_5 = arith.constant 0.000000e+00 : bf16
    %8 = vector.broadcast %cst_5 : bf16 to vector<8x128xbf16>
    %9 = arith.maximumf %7, %8 : vector<8x128xbf16>
    %c0_6 = arith.constant 0 : index
    %c0_7 = arith.constant 0 : index
    %10 = vector.load %arg4[%c0_6, %c0_7] : memref<128x128xbf16, #tpu.memory_space<vmem>>, vector<128x128xbf16>
    %cst_8 = arith.constant dense<0.000000e+00> : vector<8x128xf32>
    %11 = tpu.matmul %9, %10, %cst_8 {dimension_numbers = #tpu.dot_dimension_numbers<[1], [0], [0], [1], [0, 0, 1, 1], [], []>} : vector<8x128xbf16>, vector<128x128xbf16>, vector<8x128xf32> -> vector<8x128xf32>
    %c0_9 = arith.constant 0 : index
    %c0_10 = arith.constant 0 : index
    %12 = vector.load %arg5[%c0_9, %c0_10] : memref<1x128xf32, #tpu.memory_space<vmem>>, vector<1x128xf32>
    %13 = vector.broadcast %12 : vector<1x128xf32> to vector<8x128xf32>
    %14 = arith.addf %11, %13 : vector<8x128xf32>
    %c0_11 = arith.constant 0 : index
    %c0_12 = arith.constant 0 : index
    %15 = vector.load %arg6[%c0_11, %c0_12] : memref<8x128xf32, #tpu.memory_space<vmem>>, vector<8x128xf32>
    tpu.vector_store %arg6[%c0_11, %c0_12], %14 {strides = array<i32>} : memref<8x128xf32, #tpu.memory_space<vmem>>, vector<8x128xf32>,
    return
  }
  func.func @transform_0(%arg0: i32) -> (i32, i32) {
    %c0_i32 = arith.constant 0 : i32
    %c0_i32_0 = arith.constant 0 : i32
    return %arg0, %c0_i32 : i32, i32
  }
  func.func @transform_1(%arg0: i32) -> (i32, i32) {
    %c0_i32 = arith.constant 0 : i32
    %c0_i32_0 = arith.constant 0 : i32
    %c0_i32_1 = arith.constant 0 : i32
    return %c0_i32, %c0_i32_0 : i32, i32
  }
  func.func @transform_2(%arg0: i32) -> (i32, i32) {
    %c0_i32 = arith.constant 0 : i32
    %c0_i32_0 = arith.constant 0 : i32
    %c0_i32_1 = arith.constant 0 : i32
    return %c0_i32, %c0_i32_0 : i32, i32
  }
  func.func @transform_3(%arg0: i32) -> (i32, i32) {
    %c0_i32 = arith.constant 0 : i32
    %c0_i32_0 = arith.constant 0 : i32
    %c0_i32_1 = arith.constant 0 : i32
    return %c0_i32, %c0_i32_0 : i32, i32
  }
  func.func @transform_4(%arg0: i32) -> (i32, i32) {
    %c0_i32 = arith.constant 0 : i32
    %c0_i32_0 = arith.constant 0 : i32
    %c0_i32_1 = arith.constant 0 : i32
    return %c0_i32, %c0_i32_0 : i32, i32
  }
  func.func @transform_5(%arg0: i32) -> (i32, i32) {
    %c0_i32 = arith.constant 0 : i32
    %c0_i32_0 = arith.constant 0 : i32
    return %arg0, %c0_i32 : i32, i32
  }
}

</mosaic_0001>

<llo_original>
// kernel: tpu_custom_call.1
$region0: #{tpu_custom_call.1}
  #allocation0 [shape = 'u32[]', space=smem, size = 0x4, offset = 0x4, fixed_abs, tag = 'smem constant byte address 0x4 - core index']
  #allocation1 [shape = 'u32[144,128]{1,0:T(1,128)}', space=vmem, size = 0x12000, scoped, tag = 'internal scratch']
  %s0 = inlined_call_operand.hbm [shape: f32[8,128], index: 0, kind: input, shape index: {}]
  %s1 = inlined_call_operand.hbm [shape: f32[8,128], index: 1, kind: output, shape index: {}]
  %s2 = sld [smem:[#allocation0]]
  $region18: #{tpu_custom_call.1} parent=0
    _
  %s4 = ssub.s32 1, %s2
  %s5 = scalar_select 0, %s4, %s2
  $region1: #{tpu_custom_call.1} parent=0
    #allocation2 [shape = 'u8[4096]{0}', space=vmem, size = 0x1000, scoped, tag = 'input window, operand 0, single buffered']
    #allocation3 [shape = 's32[1]{0}', space=sflag, size = 0x4, scoped, tag = 'scoped memory for tpu_custom_call.1']
    #allocation4 [shape = 's32[1]{0}', space=sflag, size = 0x4, scoped, tag = 'scoped memory for tpu_custom_call.1']
    #allocation5 [shape = 'u8[4096]{0}', space=vmem, size = 0x1000, scoped, tag = 'output window, operand 0, single buffered']
    %6 = vsyncpa [#allocation3], 0
    %7 = vsyncpa [#allocation4], 0
    // Predicated region
    $region2: #{tpu_custom_call.1} parent=1 // pred_check
      _
    $region3: #{tpu_custom_call.1} parent=1 // pred_check_branch
      %9 = sbr.rel (0) target = $region5
    $region4: #{tpu_custom_call.1} parent=1 // pred_region
      %s11 = ssub.s32 128, 128
      %12 = vsyncadd [#allocation3], %s11
      %s14 = sshll.u32 [#allocation2], 4
      %s15 = int_to_ptr.vmem [resolvable:$true] %s14
      %17 = dma.hbm_to_vmem [thread:$0]  %s0, 128, %s15, [#allocation3]
    $region5: #{tpu_custom_call.1} parent=1 // pred_fallthru
      _
    // Predicated region
    $region6: #{tpu_custom_call.1} parent=1 // pred_check
      _
    $region7: #{tpu_custom_call.1} parent=1 // pred_check_branch
      %19 = sbr.rel (0) target = $region9
    $region8: #{tpu_custom_call.1} parent=1 // pred_region
      %20 = dma.done [#allocation3], 128
    $region9: #{tpu_custom_call.1} parent=1 // pred_fallthru
      _
    %v21 = vld [vmem:[#allocation2] sm:$0xff]
    %22 = vst [vmem:[#allocation5] sm:$0xff] %v21
    // Predicated region
    $region10: #{tpu_custom_call.1} parent=1 // pred_check
      _
    $region11: #{tpu_custom_call.1} parent=1 // pred_check_branch
      %24 = sbr.rel (0) target = $region13
    $region12: #{tpu_custom_call.1} parent=1 // pred_region
      %s26 = ssub.s32 128, 128
      %27 = vsyncadd [#allocation4], %s26
      %s29 = sshll.u32 [#allocation5], 4
      %s30 = int_to_ptr.vmem [resolvable:$true] %s29
      %32 = dma.vmem_to_hbm [thread:$0]  %s30, 128, %s1, [#allocation4]
    $region13: #{tpu_custom_call.1} parent=1 // pred_fallthru
      _
    // Predicated region
    $region14: #{tpu_custom_call.1} parent=1 // pred_check
      _
    $region15: #{tpu_custom_call.1} parent=1 // pred_check_branch
      %34 = sbr.rel (0) target = $region17
    $region16: #{tpu_custom_call.1} parent=1 // pred_region
      %35 = dma.done [#allocation4], 128
    $region17: #{tpu_custom_call.1} parent=1 // pred_fallthru
      _
    %36 = vsyncpa [#allocation3], 1
    %37 = vsyncpa [#allocation4], 1

// kernel: _mlp_forward_padded.1
$region0: #{_mlp_forward_padded.1}
  #allocation0 [shape = 'u32[]', space=smem, size = 0x4, offset = 0x4, fixed_abs, tag = 'smem constant byte address 0x4 - core index']
  #allocation1 [shape = 'u32[144,128]{1,0:T(1,128)}', space=vmem, size = 0x12000, scoped, tag = 'internal scratch']
  %s0 = inlined_call_operand.vmem [shape: bf16[8,128], index: 0, kind: input, shape index: {}]
  %s1 = inlined_call_operand.hbm [shape: bf16[128,128], index: 1, kind: input, shape index: {}]
  %s2 = inlined_call_operand.vmem [shape: f32[1,128], index: 2, kind: input, shape index: {}]
  %s3 = inlined_call_operand.hbm [shape: bf16[128,128], index: 3, kind: input, shape index: {}]
  %s4 = inlined_call_operand.vmem [shape: f32[1,128], index: 4, kind: input, shape index: {}]
  %s5 = inlined_call_operand.hbm [shape: f32[8,128], index: 5, kind: output, shape index: {}]
  %s6 = sld [smem:[#allocation0]]
  $region38: #{_mlp_forward_padded.1} parent=0
    _
  %s8 = ssub.s32 1, %s6
  %s9 = scalar_select 0, %s8, %s6
  $region1: #{_mlp_forward_padded.1} parent=0
    #allocation2 [shape = 'u8[32768]{0}', space=vmem, size = 0x8000, scoped, tag = 'input window, operand 1, single buffered']
    #allocation3 [shape = 's32[1]{0}', space=sflag, size = 0x4, scoped, tag = 'scoped memory for _mlp_forward_padded.1']
    #allocation4 [shape = 's32[1]{0}', space=sflag, size = 0x4, scoped, tag = 'scoped memory for _mlp_forward_padded.1']
    #allocation5 [shape = 'u8[32768]{0}', space=vmem, size = 0x8000, scoped, tag = 'input window, operand 3, single buffered']
    #allocation6 [shape = 's32[1]{0}', space=sflag, size = 0x4, scoped, tag = 'scoped memory for _mlp_forward_padded.1']
    #allocation7 [shape = 'u8[4096]{0}', space=vmem, size = 0x1000, scoped, tag = 'output window, operand 0, single buffered']
    %10 = vsyncpa [#allocation3], 0
    %11 = vsyncpa [#allocation6], 0
    %12 = vsyncpa [#allocation4], 0
    // Predicated region
    $region2: #{_mlp_forward_padded.1} parent=1 // pred_check
      _
    $region3: #{_mlp_forward_padded.1} parent=1 // pred_check_branch
      %14 = sbr.rel (0) target = $region5
    $region4: #{_mlp_forward_padded.1} parent=1 // pred_region
      _
    $region5: #{_mlp_forward_padded.1} parent=1 // pred_fallthru
      _
    // Predicated region
    $region6: #{_mlp_forward_padded.1} parent=1 // pred_check
      _
    $region7: #{_mlp_forward_padded.1} parent=1 // pred_check_branch
      %16 = sbr.rel (0) target = $region9
    $region8: #{_mlp_forward_padded.1} parent=1 // pred_region
      %s18 = ssub.s32 1024, 1024
      %19 = vsyncadd [#allocation3], %s18
      %s20 = sshll.u32 [#allocation2], 4
      %s21 = int_to_ptr.vmem [resolvable:$true] %s20
      %26 = dma.hbm_to_vmem [thread:$0]  %s1, 1024, %s21, [#allocation3], 64, 64, 4
    $region9: #{_mlp_forward_padded.1} parent=1 // pred_fallthru
      _
    // Predicated region
    $region10: #{_mlp_forward_padded.1} parent=1 // pred_check
      _
    $region11: #{_mlp_forward_padded.1} parent=1 // pred_check_branch
      %28 = sbr.rel (0) target = $region13
    $region12: #{_mlp_forward_padded.1} parent=1 // pred_region
      _
    $region13: #{_mlp_forward_padded.1} parent=1 // pred_fallthru
      _
    // Predicated region
    $region14: #{_mlp_forward_padded.1} parent=1 // pred_check
      _
    $region15: #{_mlp_forward_padded.1} parent=1 // pred_check_branch
      %30 = sbr.rel (0) target = $region17
    $region16: #{_mlp_forward_padded.1} parent=1 // pred_region
      %s32 = ssub.s32 1024, 1024
      %33 = vsyncadd [#allocation6], %s32
      %s34 = sshll.u32 [#allocation5], 4
      %s35 = int_to_ptr.vmem [resolvable:$true] %s34
      %40 = dma.hbm_to_vmem [thread:$0]  %s3, 1024, %s35, [#allocation6], 64, 64, 4
    $region17: #{_mlp_forward_padded.1} parent=1 // pred_fallthru
      _
    // Predicated region
    $region18: #{_mlp_forward_padded.1} parent=1 // pred_check
      _
    $region19: #{_mlp_forward_padded.1} parent=1 // pred_check_branch
      %42 = sbr.rel (0) target = $region21
    $region20: #{_mlp_forward_padded.1} parent=1 // pred_region
      _
    $region21: #{_mlp_forward_padded.1} parent=1 // pred_fallthru
      _
    // Predicated region
    $region22: #{_mlp_forward_padded.1} parent=1 // pred_check
      _
    $region23: #{_mlp_forward_padded.1} parent=1 // pred_check_branch
      %44 = sbr.rel (0) target = $region25
    $region24: #{_mlp_forward_padded.1} parent=1 // pred_region
      %45 = dma.done [#allocation3], 1024
    $region25: #{_mlp_forward_padded.1} parent=1 // pred_fallthru
      _
    // Predicated region
    $region26: #{_mlp_forward_padded.1} parent=1 // pred_check
      _
    $region27: #{_mlp_forward_padded.1} parent=1 // pred_check_branch
      %47 = sbr.rel (0) target = $region29
    $region28: #{_mlp_forward_padded.1} parent=1 // pred_region
      %48 = dma.done [#allocation6], 1024
    $region29: #{_mlp_forward_padded.1} parent=1 // pred_fallthru
      _
    %v50 = vld [vmem:[%s0] sm:$0xf]
    %v51 = vld [vmem:[#allocation2] sm:$0xf]
    %v52 = vld [vmem:[#allocation2 + $0x4] sm:$0xf]
    %v53 = vld [vmem:[#allocation2 + $0x8] sm:$0xf]
    %v54 = vld [vmem:[#allocation2 + $0xc] sm:$0xf]
    %v55 = vld [vmem:[#allocation2 + $0x10] sm:$0xf]
    %v56 = vld [vmem:[#allocation2 + $0x14] sm:$0xf]
    %v57 = vld [vmem:[#allocation2 + $0x18] sm:$0xf]
    %v58 = vld [vmem:[#allocation2 + $0x1c] sm:$0xf]
    %v59 = vld [vmem:[#allocation2 + $0x20] sm:$0xf]
    %v60 = vld [vmem:[#allocation2 + $0x24] sm:$0xf]
    %v61 = vld [vmem:[#allocation2 + $0x28] sm:$0xf]
    %v62 = vld [vmem:[#allocation2 + $0x2c] sm:$0xf]
    %v63 = vld [vmem:[#allocation2 + $0x30] sm:$0xf]
    %v64 = vld [vmem:[#allocation2 + $0x34] sm:$0xf]
    %v65 = vld [vmem:[#allocation2 + $0x38] sm:$0xf]
    %v66 = vld [vmem:[#allocation2 + $0x3c] sm:$0xf]
    %v83 = vunpack.c.l.b16 %v51
    %v84 = vunpack.c.l.b16 %v52
    %v85 = vunpack.c.l.b16 %v53
    %v86 = vunpack.c.l.b16 %v54
    %v87 = vunpack.c.l.b16 %v55
    %v88 = vunpack.c.l.b16 %v56
    %v89 = vunpack.c.l.b16 %v57
    %v90 = vunpack.c.l.b16 %v58
    %v91 = vunpack.c.l.b16 %v59
    %v92 = vunpack.c.l.b16 %v60
    %v93 = vunpack.c.l.b16 %v61
    %v94 = vunpack.c.l.b16 %v62
    %v95 = vunpack.c.l.b16 %v63
    %v96 = vunpack.c.l.b16 %v64
    %v97 = vunpack.c.l.b16 %v65
    %v98 = vunpack.c.l.b16 %v66
    %v99 = vpack.c.b16 %v84, %v83
    %v100 = vpack.c.b16 %v86, %v85
    %v101 = vpack.c.b16 %v88, %v87
    %v102 = vpack.c.b16 %v90, %v89
    %v103 = vpack.c.b16 %v92, %v91
    %v104 = vpack.c.b16 %v94, %v93
    %v105 = vpack.c.b16 %v96, %v95
    %v106 = vpack.c.b16 %v98, %v97
    %115 = vmatprep.subr.bf16.mxu0 0
    %116 = vmatpush1.bf16.msra.mxu0 %v99
    %117 = vmatprep.subr.bf16.mxu0 0
    %118 = vmatpush1.bf16.msra.mxu0 %v100
    %119 = vmatprep.subr.bf16.mxu0 0
    %120 = vmatpush1.bf16.msra.mxu0 %v101
    %121 = vmatprep.subr.bf16.mxu0 0
    %122 = vmatpush1.bf16.msra.mxu0 %v102
    %123 = vmatprep.subr.bf16.mxu0 0
    %124 = vmatpush1.bf16.msra.mxu0 %v103
    %125 = vmatprep.subr.bf16.mxu0 0
    %126 = vmatpush1.bf16.msra.mxu0 %v104
    %127 = vmatprep.subr.bf16.mxu0 0
    %128 = vmatpush1.bf16.msra.mxu0 %v105
    %129 = vmatprep.subr.bf16.mxu0 0
    %130 = vmatpush1.bf16.msra.mxu0 %v106
    %131 = vmatprep.subr.bf16.mxu0 0
    %132 = vmatpush1.bf16.msra.mxu0 0
    %133 = vmatprep.subr.bf16.mxu0 0
    %134 = vmatpush1.bf16.msra.mxu0 0
    %135 = vmatprep.subr.bf16.mxu0 0
    %136 = vmatpush1.bf16.msra.mxu0 0
    %137 = vmatprep.subr.bf16.mxu0 0
    %138 = vmatpush1.bf16.msra.mxu0 0
    %139 = vmatprep.subr.bf16.mxu0 0
    %140 = vmatpush1.bf16.msra.mxu0 0
    %141 = vmatprep.subr.bf16.mxu0 0
    %142 = vmatpush1.bf16.msra.mxu0 0
    %143 = vmatprep.subr.bf16.mxu0 0
    %144 = vmatpush1.bf16.msra.mxu0 0
    %145 = vmatprep.subr.bf16.mxu0 0
    %146 = vmatpush1.bf16.msra.mxu0 0
    %147 = vmatprep.mubr.bf16.mxu0 0
    %148 = vmatmul.mubr.bf16.gmra.mrb[0].mxu0 %v50
    %v149 = vpop.f32.mrb[0].mxu0
    %v150 = vadd.f32 0.0, %v149
    %v151 = vpop.f32.mrb[0].mxu0
    %v152 = vpop.f32.mrb[0].mxu0
    %v153 = vpop.f32.mrb[0].mxu0
    %154 = vdwg.mxu0
    %v155 = vld [vmem:[%s2] sm:$0x1]
    %v156 = vpack.c.bf16 %v150, %v150
    %v157 = vpack.c.bf16 %v155, %v155
    %v159 = vpack.i.b16 %v157, %v157
    %v161 = vlaneseq
    %v162 = vshrl.u32 %v161, 7
    %v163 = vsub.s32 0, %v162
    %v164 = vrot.slane %v159, %v163
    %v165 = vadd.bf16 %v156, %v164
    %v166 = vmax.bf16 %v165, 0
    %v167 = vld [vmem:[#allocation5] sm:$0xf]
    %v168 = vld [vmem:[#allocation5 + $0x4] sm:$0xf]
    %v169 = vld [vmem:[#allocation5 + $0x8] sm:$0xf]
    %v170 = vld [vmem:[#allocation5 + $0xc] sm:$0xf]
    %v171 = vld [vmem:[#allocation5 + $0x10] sm:$0xf]
    %v172 = vld [vmem:[#allocation5 + $0x14] sm:$0xf]
    %v173 = vld [vmem:[#allocation5 + $0x18] sm:$0xf]
    %v174 = vld [vmem:[#allocation5 + $0x1c] sm:$0xf]
    %v175 = vld [vmem:[#allocation5 + $0x20] sm:$0xf]
    %v176 = vld [vmem:[#allocation5 + $0x24] sm:$0xf]
    %v177 = vld [vmem:[#allocation5 + $0x28] sm:$0xf]
    %v178 = vld [vmem:[#allocation5 + $0x2c] sm:$0xf]
    %v179 = vld [vmem:[#allocation5 + $0x30] sm:$0xf]
    %v180 = vld [vmem:[#allocation5 + $0x34] sm:$0xf]
    %v181 = vld [vmem:[#allocation5 + $0x38] sm:$0xf]
    %v182 = vld [vmem:[#allocation5 + $0x3c] sm:$0xf]
    %v183 = vld [vmem:[%s4] sm:$0x1]
    %v185 = vlaneseq
    %v186 = vshrl.u32 %v185, 7
    %v187 = vsub.s32 0, %v186
    %v188 = vrot.slane %v183, %v187
    %v206 = vunpack.c.l.b16 %v167
    %v207 = vunpack.c.l.b16 %v168
    %v208 = vunpack.c.l.b16 %v169
    %v209 = vunpack.c.l.b16 %v170
    %v210 = vunpack.c.l.b16 %v171
    %v211 = vunpack.c.l.b16 %v172
    %v212 = vunpack.c.l.b16 %v173
    %v213 = vunpack.c.l.b16 %v174
    %v214 = vunpack.c.l.b16 %v175
    %v215 = vunpack.c.l.b16 %v176
    %v216 = vunpack.c.l.b16 %v177
    %v217 = vunpack.c.l.b16 %v178
    %v218 = vunpack.c.l.b16 %v179
    %v219 = vunpack.c.l.b16 %v180
    %v220 = vunpack.c.l.b16 %v181
    %v221 = vunpack.c.l.b16 %v182
    %v222 = vpack.c.b16 %v207, %v206
    %v223 = vpack.c.b16 %v209, %v208
    %v224 = vpack.c.b16 %v211, %v210
    %v225 = vpack.c.b16 %v213, %v212
    %v226 = vpack.c.b16 %v215, %v214
    %v227 = vpack.c.b16 %v217, %v216
    %v228 = vpack.c.b16 %v219, %v218
    %v229 = vpack.c.b16 %v221, %v220
    %238 = vmatprep.subr.bf16.mxu0 0
    %239 = vmatpush1.bf16.msra.mxu0 %v222
    %240 = vmatprep.subr.bf16.mxu0 0
    %241 = vmatpush1.bf16.msra.mxu0 %v223
    %242 = vmatprep.subr.bf16.mxu0 0
    %243 = vmatpush1.bf16.msra.mxu0 %v224
    %244 = vmatprep.subr.bf16.mxu0 0
    %245 = vmatpush1.bf16.msra.mxu0 %v225
    %246 = vmatprep.subr.bf16.mxu0 0
    %247 = vmatpush1.bf16.msra.mxu0 %v226
    %248 = vmatprep.subr.bf16.mxu0 0
    %249 = vmatpush1.bf16.msra.mxu0 %v227
    %250 = vmatprep.subr.bf16.mxu0 0
    %251 = vmatpush1.bf16.msra.mxu0 %v228
    %252 = vmatprep.subr.bf16.mxu0 0
    %253 = vmatpush1.bf16.msra.mxu0 %v229
    %254 = vmatprep.subr.bf16.mxu0 0
    %255 = vmatpush1.bf16.msra.mxu0 0
    %256 = vmatprep.subr.bf16.mxu0 0
    %257 = vmatpush1.bf16.msra.mxu0 0
    %258 = vmatprep.subr.bf16.mxu0 0
    %259 = vmatpush1.bf16.msra.mxu0 0
    %260 = vmatprep.subr.bf16.mxu0 0
    %261 = vmatpush1.bf16.msra.mxu0 0
    %262 = vmatprep.subr.bf16.mxu0 0
    %263 = vmatpush1.bf16.msra.mxu0 0
    %264 = vmatprep.subr.bf16.mxu0 0
    %265 = vmatpush1.bf16.msra.mxu0 0
    %266 = vmatprep.subr.bf16.mxu0 0
    %267 = vmatpush1.bf16.msra.mxu0 0
    %268 = vmatprep.subr.bf16.mxu0 0
    %269 = vmatpush1.bf16.msra.mxu0 0
    %270 = vmatprep.mubr.bf16.mxu0 0
    %271 = vmatmul.mubr.bf16.gmra.mrb[0].mxu0 %v166
    %v272 = vpop.f32.mrb[0].mxu0
    %v273 = vadd.f32 %v188, %v272
    %v274 = vpop.f32.mrb[0].mxu0
    %v275 = vpop.f32.mrb[0].mxu0
    %v276 = vpop.f32.mrb[0].mxu0
    %277 = vdwg.mxu0
    %278 = vst [vmem:[#allocation7] sm:$0xff] %v273
    // Predicated region
    $region30: #{_mlp_forward_padded.1} parent=1 // pred_check
      _
    $region31: #{_mlp_forward_padded.1} parent=1 // pred_check_branch
      %280 = sbr.rel (0) target = $region33
    $region32: #{_mlp_forward_padded.1} parent=1 // pred_region
      %s282 = ssub.s32 128, 128
      %283 = vsyncadd [#allocation4], %s282
      %s285 = sshll.u32 [#allocation7], 4
      %s286 = int_to_ptr.vmem [resolvable:$true] %s285
      %288 = dma.vmem_to_hbm [thread:$0]  %s286, 128, %s5, [#allocation4]
    $region33: #{_mlp_forward_padded.1} parent=1 // pred_fallthru
      _
    // Predicated region
    $region34: #{_mlp_forward_padded.1} parent=1 // pred_check
      _
    $region35: #{_mlp_forward_padded.1} parent=1 // pred_check_branch
      %290 = sbr.rel (0) target = $region37
    $region36: #{_mlp_forward_padded.1} parent=1 // pred_region
      %291 = dma.done [#allocation4], 128
    $region37: #{_mlp_forward_padded.1} parent=1 // pred_fallthru
      _
    %292 = vsyncpa [#allocation3], 1
    %293 = vsyncpa [#allocation6], 1
    %294 = vsyncpa [#allocation4], 1

</llo_original>
